<compile_context>
chip_gen: v6e
topology: v6e:2x2x1
jax: 0.10.0
libtpu: 0.0.40
codegen_flags: <defaults>
</compile_context>

<pallas_src>
import functools

import jax
import jax.numpy as jnp
from jax.experimental import pallas as pl
from jax.experimental.pallas import tpu as pltpu

_LANE = 128
_SUBLANE = 8


# ---------------------------------------------------------------------------
# Kernels
# ---------------------------------------------------------------------------
def _excitation(pooled, w1, b1, w2, b2):
    """Tiny SE MLP on the VPU: Linear -> LeakyReLU(0.05) -> Linear -> Sigmoid.

    pooled: (N, C) f32, w1: (C, Cr), b1: (1, Cr), w2: (Cr, C), b2: (1, C).
    """
    h = jnp.sum(pooled[:, :, None] * w1[None, :, :], axis=1) + b1      # (N, Cr)
    h = jnp.where(h > 0, h, 0.05 * h)                                   # LeakyReLU(0.05)
    s = jnp.sum(h[:, :, None] * w2[None, :, :], axis=1) + b2            # (N, C)
    return jax.nn.sigmoid(s)


def _se_fused_kernel(x_ref, w1_ref, b1_ref, w2_ref, b2_ref, o_ref, *, inv_hw):
    # x_ref/o_ref: (Bt, C, HW); weights: (C,Cr)/(1,Cr)/(Cr,C)/(1,C) in f32.
    xb = x_ref[...]                                                     # (Bt, C, HW)
    # Squeeze: f32 accumulation fused into the reduce (no f32 copy of the block).
    pooled = jnp.sum(xb, axis=-1, dtype=jnp.float32) * inv_hw           # (Bt, C)
    s = _excitation(pooled, w1_ref[...], b1_ref[...], w2_ref[...], b2_ref[...])
    # Gate is rounded to the input dtype before the multiply (matches applying
    # the gate in the activation dtype; exact for f32 inputs).
    o_ref[...] = xb * s[:, :, None].astype(xb.dtype)


def _se_pool_gate_kernel(x_ref, w1_ref, b1_ref, w2_ref, b2_ref, gate_ref,
                         *, hw, hw_tile, inv_hw):
    # Pass 1 of the split path: accumulate per-(b, c) sums over HW tiles in the
    # VMEM-resident gate block, then apply the excitation MLP at the last tile.
    h_idx = pl.program_id(1)

    @pl.when(h_idx == 0)
    def _():
        gate_ref[...] = jnp.zeros_like(gate_ref)

    xb = x_ref[...]                                                     # (1, C, hw_tile)
    lane = jax.lax.broadcasted_iota(jnp.int32, xb.shape, 2)
    valid = (h_idx * hw_tile + lane) < hw                               # ragged last tile
    xz = jnp.where(valid, xb, jnp.zeros_like(xb))
    gate_ref[...] += jnp.sum(xz, axis=-1, dtype=jnp.float32)[:, None, :]

    @pl.when(h_idx == pl.num_programs(1) - 1)
    def _():
        pooled = gate_ref[...][:, 0, :] * inv_hw                        # (1, C)
        s = _excitation(pooled, w1_ref[...], b1_ref[...], w2_ref[...], b2_ref[...])
        gate_ref[...] = s[:, None, :]


def _se_scale_kernel(gate_ref, x_ref, o_ref):
    # Pass 2 of the split path: re-stream x and apply the per-channel gate.
    xb = x_ref[...]                                                     # (1, C, hw_tile)
    s = gate_ref[...][:, 0, :]                                          # (1, C) f32
    o_ref[...] = xb * s[:, :, None].astype(xb.dtype)


# ---------------------------------------------------------------------------
# Tiling / VMEM policy
# ---------------------------------------------------------------------------
def _round_up(n, m):
    return ((n + m - 1) // m) * m


def _vmem_capacity_bytes():
    try:
        info = pltpu.get_tpu_info()
        cap = getattr(info, "vmem_capacity_bytes", None)
        if cap:
            return int(cap)
    except Exception:
        pass
    return 64 * 1024 * 1024  # conservative fallback (v7x per-TC VMEM)


def _pick_b_tile(B, row_vmem_bytes, block_budget_bytes):
    """Batch tile (divisor of B) for the fused path, or None if one row does not
    fit.  Prefer >=8 grid steps (v7x megacore + pipeline depth), then even step
    counts, then block sizes near ~8 MiB; never exceed the resident budget
    (2x input + 2x output double-buffered blocks)."""
    max_block = block_budget_bytes // 4
    fitting = [d for d in range(1, B + 1)
               if B % d == 0 and d * row_vmem_bytes <= max_block]
    if not fitting:
        return None
    target = 8 * 1024 * 1024

    def key(d):
        steps = B // d
        step_pref = 0 if steps >= 8 else (1 if steps >= 4 else (2 if steps >= 2 else 3))
        parity = 0 if steps % 2 == 0 else 1
        return (step_pref, parity, abs(d * row_vmem_bytes - target))

    return min(fitting, key=key)


def _pick_hw_tile(HW, C_pad, itemsize, block_budget_bytes):
    """Spatial tile (multiple of 128, or full HW) for the split path, targeting
    ~8 MiB blocks within the resident budget."""
    desired = min(8 * 1024 * 1024,
                  max(block_budget_bytes // 4, _LANE * C_pad * itemsize))
    lanes = max(_LANE, (desired // (C_pad * itemsize)) // _LANE * _LANE)
    if lanes >= HW:
        return HW                     # full extent (exempt from the 128 rule)
    return int(lanes)
    # TODO(synk): if C_pad * 128 * itemsize alone exceeds the budget (huge C),
    # a channel-tiled variant would be needed; not implemented.


# ---------------------------------------------------------------------------
# pallas_call wrappers
# ---------------------------------------------------------------------------
def _se_fused_call(x_flat, w1, b1, w2, b2, *, b_tile, inv_hw, vmem_limit):
    B, C, HW = x_flat.shape
    Cr = w1.shape[1]
    itemsize = x_flat.dtype.itemsize
    cost = pl.CostEstimate(flops=3 * x_flat.size,
                           transcendentals=B * C,
                           bytes_accessed=2 * x_flat.size * itemsize)
    # TODO(synk): input_output_aliases={0: 0} would save one HBM allocation when
    # the caller donates x; left off so x remains usable after the call.
    return pl.pallas_call(
        functools.partial(_se_fused_kernel, inv_hw=inv_hw),
        out_shape=jax.ShapeDtypeStruct((B, C, HW), x_flat.dtype),
        grid_spec=pltpu.PrefetchScalarGridSpec(
            num_scalar_prefetch=0,
            grid=(B // b_tile,),
            in_specs=[
                pl.BlockSpec((b_tile, C, HW), lambda b: (b, 0, 0)),   # x slab
                pl.BlockSpec((C, Cr), lambda b: (0, 0)),              # w1
                pl.BlockSpec((1, Cr), lambda b: (0, 0)),              # b1
                pl.BlockSpec((Cr, C), lambda b: (0, 0)),              # w2
                pl.BlockSpec((1, C), lambda b: (0, 0)),               # b2
            ],
            out_specs=pl.BlockSpec((b_tile, C, HW), lambda b: (b, 0, 0)),
        ),
        compiler_params=pltpu.CompilerParams(
            dimension_semantics=("parallel",),
            vmem_limit_bytes=vmem_limit,
        ),
        cost_estimate=cost,
    )(x_flat, w1, b1, w2, b2)


def _se_split_call(x_flat, w1, b1, w2, b2, *, hw_tile, inv_hw, vmem_limit):
    B, C, HW = x_flat.shape
    Cr = w1.shape[1]
    n_hw = pl.cdiv(HW, hw_tile)
    itemsize = x_flat.dtype.itemsize

    # Pass 1: pooled sums over HW tiles -> gate (B, 1, C) in f32.
    gate = pl.pallas_call(
        functools.partial(_se_pool_gate_kernel, hw=HW, hw_tile=hw_tile, inv_hw=inv_hw),
        out_shape=jax.ShapeDtypeStruct((B, 1, C), jnp.float32),
        grid_spec=pltpu.PrefetchScalarGridSpec(
            num_scalar_prefetch=0,
            grid=(B, n_hw),
            in_specs=[
                pl.BlockSpec((1, C, hw_tile), lambda b, h: (b, 0, h)),
                pl.BlockSpec((C, Cr), lambda b, h: (0, 0)),
                pl.BlockSpec((1, Cr), lambda b, h: (0, 0)),
                pl.BlockSpec((Cr, C), lambda b, h: (0, 0)),
                pl.BlockSpec((1, C), lambda b, h: (0, 0)),
            ],
            out_specs=pl.BlockSpec((1, 1, C), lambda b, h: (b, 0, 0)),
        ),
        compiler_params=pltpu.CompilerParams(
            dimension_semantics=("parallel", "arbitrary"),
            vmem_limit_bytes=vmem_limit,
        ),
        cost_estimate=pl.CostEstimate(flops=x_flat.size, transcendentals=B * C,
                                      bytes_accessed=x_flat.size * itemsize),
    )(x_flat, w1, b1, w2, b2)

    # Pass 2: re-stream x and scale by the gate.
    return pl.pallas_call(
        _se_scale_kernel,
        out_shape=jax.ShapeDtypeStruct((B, C, HW), x_flat.dtype),
        grid_spec=pltpu.PrefetchScalarGridSpec(
            num_scalar_prefetch=0,
            grid=(B, n_hw),
            in_specs=[
                pl.BlockSpec((1, 1, C), lambda b, h: (b, 0, 0)),
                pl.BlockSpec((1, C, hw_tile), lambda b, h: (b, 0, h)),
            ],
            out_specs=pl.BlockSpec((1, C, hw_tile), lambda b, h: (b, 0, h)),
        ),
        compiler_params=pltpu.CompilerParams(
            dimension_semantics=("parallel", "parallel"),
            vmem_limit_bytes=vmem_limit,
        ),
        cost_estimate=pl.CostEstimate(flops=x_flat.size, transcendentals=0,
                                      bytes_accessed=2 * x_flat.size * itemsize),
    )(gate, x_flat)


def se_recalibration(x, w1, b1, w2, b2, *, max_resident_bytes=None):
    """SE recalibration.  x: (B, C, H, W) or (B, C, D, H, W).  Returns same
    shape/dtype.  Weights use (in, out) layout (transpose of nn.Linear)."""
    B, C = int(x.shape[0]), int(x.shape[1])
    HW = 1
    for s in x.shape[2:]:
        HW *= int(s)
    Cr = int(w1.shape[1])
    inv_hw = float(1.0 / HW)

    x_flat = x.reshape(B, C, HW)
    w1_f = w1.astype(jnp.float32)
    w2_f = w2.astype(jnp.float32)
    b1_2d = b1.reshape(1, Cr).astype(jnp.float32)
    b2_2d = b2.reshape(1, C).astype(jnp.float32)

    # VMEM sizing only (no HBM padding): account for sublane/lane tile padding.
    itemsize = jnp.dtype(x.dtype).itemsize
    sub_pack = _SUBLANE * max(1, 4 // itemsize)           # 8 f32 / 16 bf16 / 32 i8
    C_pad = _round_up(C, sub_pack)
    HW_pad = _round_up(HW, _LANE)
    row_vmem = C_pad * HW_pad * itemsize                  # one batch row, one buffer

    vmem_cap = _vmem_capacity_bytes()
    block_budget = min(int(0.7 * vmem_cap), 48 * 1024 * 1024)   # safe on v7x 64 MiB
    if max_resident_bytes is not None:
        block_budget = int(max_resident_bytes)
    vmem_limit = int(min(vmem_cap * 0.85, 100 * 1024 * 1024))

    b_tile = _pick_b_tile(B, row_vmem, block_budget)
    fused_steps = (B // b_tile) if b_tile is not None else 0
    hw_tile = _pick_hw_tile(HW, C_pad, itemsize, block_budget)
    n_hw = pl.cdiv(HW, hw_tile)

    # Split path when a batch row does not fit the budget, or when the fused
    # grid would be a single step but the spatial axis offers parallelism.
    use_split = (b_tile is None) or (fused_steps < 2 and n_hw >= 4)

    if use_split:
        out_flat = _se_split_call(x_flat, w1_f, b1_2d, w2_f, b2_2d,
                                  hw_tile=hw_tile, inv_hw=inv_hw,
                                  vmem_limit=vmem_limit)
    else:
        out_flat = _se_fused_call(x_flat, w1_f, b1_2d, w2_f, b2_2d,
                                  b_tile=b_tile, inv_hw=inv_hw,
                                  vmem_limit=vmem_limit)
    return out_flat.reshape(x.shape)
    # TODO(synk): for C not a multiple of the sublane pack, a 2D (B*C, HW) view
    # would remove sublane padding, but needs an in-kernel (rows,1)->(b,C)
    # relayout; kept 3D for lowering robustness (HBM traffic is unaffected).


def se_recalibration_ref(x, w1, b1, w2, b2):
    axes = tuple(range(2, x.ndim))
    pooled = jnp.mean(x, axis=axes)                       # (B, C)
    h = pooled @ w1 + b1
    h = jnp.where(h > 0, h, 0.05 * h)
    s = jax.nn.sigmoid(h @ w2 + b2)
    return x * s.reshape(s.shape + (1,) * (x.ndim - 2))


if __name__ == "__main__":
    # Small shapes consistent with the module: batch=2, channels=4, 16x16 spatial.
    B, C, H, W = 2, 4, 16, 16
    se_reduction = 0.5
    Cr = int(C * se_reduction)                            # 2

    key = jax.random.PRNGKey(0)
    kx, k1, k2, k3, k4 = jax.random.split(key, 5)

    x = jax.random.normal(kx, (B, C, H, W), dtype=jnp.float32)
    # Synthetic weights; PyTorch Linear stores (out, in) — we keep (in, out).
    w1 = jax.random.uniform(k1, (C, Cr), jnp.float32, -0.5, 0.5)
    b1 = jax.random.uniform(k2, (Cr,), jnp.float32, -0.5, 0.5)
    w2 = jax.random.uniform(k3, (Cr, C), jnp.float32, -0.5, 0.5)
    b2 = jax.random.uniform(k4, (C,), jnp.float32, -0.5, 0.5)

    # 1) Fused single-pass path.
    out = jax.block_until_ready(se_recalibration(x, w1, b1, w2, b2))
    ref = se_recalibration_ref(x, w1, b1, w2, b2)
    assert out.shape == x.shape and out.dtype == x.dtype
    assert jnp.allclose(out, ref, atol=1e-5, rtol=1e-5)

    # 2) Non-128-multiple spatial size (no HBM pad/crop; full-extent lane dim).
    x2 = jax.random.normal(jax.random.PRNGKey(1), (B, C, 7, 7), dtype=jnp.float32)
    out2 = jax.block_until_ready(se_recalibration(x2, w1, b1, w2, b2))
    ref2 = se_recalibration_ref(x2, w1, b1, w2, b2)
    assert jnp.allclose(out2, ref2, atol=1e-5, rtol=1e-5)

    # 3) Force the two-pass fallback (used when one batch row exceeds the VMEM
    #    budget) so that path is exercised too.
    out3 = jax.block_until_ready(
        se_recalibration(x, w1, b1, w2, b2, max_resident_bytes=4096))
    assert jnp.allclose(out3, ref, atol=1e-5, rtol=1e-5)

    print("KERNEL_OK")
</pallas_src>

<mosaic_0001>
module attributes {stable_mosaic.version = 11 : i64} {
  func.func @_se_fused_kernel(%arg0: i32, %arg1: memref<1x4x256xf32, #tpu.memory_space<vmem>>, %arg2: memref<4x2xf32, #tpu.memory_space<vmem>>, %arg3: memref<1x2xf32, #tpu.memory_space<vmem>>, %arg4: memref<2x4xf32, #tpu.memory_space<vmem>>, %arg5: memref<1x4xf32, #tpu.memory_space<vmem>>, %arg6: memref<1x4x256xf32, #tpu.memory_space<vmem>>) attributes {dimension_semantics = [#tpu.dimension_semantics<parallel>], iteration_bounds = array<i64: 2>, scalar_prefetch = 0 : i64, scratch_operands = 0 : i64, tpu.core_type = #tpu.core_type<tc>, window_params = [{transform_indices = @transform_0, window_bounds = array<i64: 1, 4, 256>}, {pipeline_mode = #tpu.pipeline_mode<synchronous>, transform_indices = @transform_1, window_bounds = array<i64: 4, 2>}, {pipeline_mode = #tpu.pipeline_mode<synchronous>, transform_indices = @transform_2, window_bounds = array<i64: 1, 2>}, {pipeline_mode = #tpu.pipeline_mode<synchronous>, transform_indices = @transform_3, window_bounds = array<i64: 2, 4>}, {pipeline_mode = #tpu.pipeline_mode<synchronous>, transform_indices = @transform_4, window_bounds = array<i64: 1, 4>}, {transform_indices = @transform_5, window_bounds = array<i64: 1, 4, 256>}]} {
    %c0 = arith.constant 0 : index
    %c0_0 = arith.constant 0 : index
    %c0_1 = arith.constant 0 : index
    %0 = vector.load %arg1[%c0, %c0_0, %c0_1] : memref<1x4x256xf32, #tpu.memory_space<vmem>>, vector<1x4x256xf32>
    %cst = arith.constant dense<0.000000e+00> : vector<1x4xf32>
    %1 = vector.multi_reduction <add>, %0, %cst [2] : vector<1x4x256xf32> to vector<1x4xf32>
    %cst_2 = arith.constant 3.906250e-03 : f32
    %2 = vector.broadcast %cst_2 : f32 to vector<1x4xf32>
    %3 = arith.mulf %1, %2 : vector<1x4xf32>
    %c0_3 = arith.constant 0 : index
    %c0_4 = arith.constant 0 : index
    %4 = vector.load %arg2[%c0_3, %c0_4] : memref<4x2xf32, #tpu.memory_space<vmem>>, vector<4x2xf32>
    %c0_5 = arith.constant 0 : index
    %c0_6 = arith.constant 0 : index
    %5 = vector.load %arg3[%c0_5, %c0_6] : memref<1x2xf32, #tpu.memory_space<vmem>>, vector<1x2xf32>
    %c0_7 = arith.constant 0 : index
    %c0_8 = arith.constant 0 : index
    %6 = vector.load %arg4[%c0_7, %c0_8] : memref<2x4xf32, #tpu.memory_space<vmem>>, vector<2x4xf32>
    %c0_9 = arith.constant 0 : index
    %c0_10 = arith.constant 0 : index
    %7 = vector.load %arg5[%c0_9, %c0_10] : memref<1x4xf32, #tpu.memory_space<vmem>>, vector<1x4xf32>
    %8 = vector.shape_cast %3 : vector<1x4xf32> to vector<1x4x1xf32>
    %9 = vector.shape_cast %4 : vector<4x2xf32> to vector<1x4x2xf32>
    %10 = vector.broadcast %8 : vector<1x4x1xf32> to vector<1x4x2xf32>
    %11 = arith.mulf %10, %9 : vector<1x4x2xf32>
    %cst_11 = arith.constant dense<0.000000e+00> : vector<1x2xf32>
    %12 = vector.multi_reduction <add>, %11, %cst_11 [1] : vector<1x4x2xf32> to vector<1x2xf32>
    %13 = arith.addf %12, %5 : vector<1x2xf32>
    %cst_12 = arith.constant 0.000000e+00 : f32
    %14 = vector.broadcast %cst_12 : f32 to vector<1x2xf32>
    %15 = arith.cmpf ogt, %13, %14 : vector<1x2xf32>
    %cst_13 = arith.constant 5.000000e-02 : f32
    %16 = vector.broadcast %cst_13 : f32 to vector<1x2xf32>
    %17 = arith.mulf %16, %13 : vector<1x2xf32>
    %18 = arith.select %15, %13, %17 : vector<1x2xi1>, vector<1x2xf32>
    %19 = vector.shape_cast %18 : vector<1x2xf32> to vector<1x2x1xf32>
    %20 = vector.shape_cast %6 : vector<2x4xf32> to vector<1x2x4xf32>
    %21 = vector.broadcast %19 : vector<1x2x1xf32> to vector<1x2x4xf32>
    %22 = arith.mulf %21, %20 : vector<1x2x4xf32>
    %cst_14 = arith.constant dense<0.000000e+00> : vector<1x4xf32>
    %23 = vector.multi_reduction <add>, %22, %cst_14 [1] : vector<1x2x4xf32> to vector<1x4xf32>
    %24 = arith.addf %23, %7 : vector<1x4xf32>
    %25 = arith.negf %24 : vector<1x4xf32>
    %26 = math.exp %25 : vector<1x4xf32>
    %cst_15 = arith.constant 1.000000e+00 : f32
    %27 = vector.broadcast %cst_15 : f32 to vector<1x4xf32>
    %28 = arith.addf %27, %26 : vector<1x4xf32>
    %29 = arith.divf %27, %28 : vector<1x4xf32>
    %30 = vector.shape_cast %29 : vector<1x4xf32> to vector<1x4x1xf32>
    %31 = vector.broadcast %30 : vector<1x4x1xf32> to vector<1x4x256xf32>
    %32 = arith.mulf %0, %31 : vector<1x4x256xf32>
    %c0_16 = arith.constant 0 : index
    %c0_17 = arith.constant 0 : index
    %c0_18 = arith.constant 0 : index
    %33 = vector.load %arg6[%c0_16, %c0_17, %c0_18] : memref<1x4x256xf32, #tpu.memory_space<vmem>>, vector<1x4x256xf32>
    tpu.vector_store %arg6[%c0_16, %c0_17, %c0_18], %32 {strides = array<i32>} : memref<1x4x256xf32, #tpu.memory_space<vmem>>, vector<1x4x256xf32>,
    return
  }
  func.func @transform_0(%arg0: i32) -> (i32, i32, i32) {
    %c0_i32 = arith.constant 0 : i32
    %c0_i32_0 = arith.constant 0 : i32
    %c0_i32_1 = arith.constant 0 : i32
    return %arg0, %c0_i32, %c0_i32_0 : i32, i32, i32
  }
  func.func @transform_1(%arg0: i32) -> (i32, i32) {
    %c0_i32 = arith.constant 0 : i32
    %c0_i32_0 = arith.constant 0 : i32
    %c0_i32_1 = arith.constant 0 : i32
    return %c0_i32, %c0_i32_0 : i32, i32
  }
  func.func @transform_2(%arg0: i32) -> (i32, i32) {
    %c0_i32 = arith.constant 0 : i32
    %c0_i32_0 = arith.constant 0 : i32
    %c0_i32_1 = arith.constant 0 : i32
    return %c0_i32, %c0_i32_0 : i32, i32
  }
  func.func @transform_3(%arg0: i32) -> (i32, i32) {
    %c0_i32 = arith.constant 0 : i32
    %c0_i32_0 = arith.constant 0 : i32
    %c0_i32_1 = arith.constant 0 : i32
    return %c0_i32, %c0_i32_0 : i32, i32
  }
  func.func @transform_4(%arg0: i32) -> (i32, i32) {
    %c0_i32 = arith.constant 0 : i32
    %c0_i32_0 = arith.constant 0 : i32
    %c0_i32_1 = arith.constant 0 : i32
    return %c0_i32, %c0_i32_0 : i32, i32
  }
  func.func @transform_5(%arg0: i32) -> (i32, i32, i32) {
    %c0_i32 = arith.constant 0 : i32
    %c0_i32_0 = arith.constant 0 : i32
    %c0_i32_1 = arith.constant 0 : i32
    return %arg0, %c0_i32, %c0_i32_0 : i32, i32, i32
  }
}

</mosaic_0001>

<llo_original>
// kernel: tpu_custom_call.1
$region0: #{tpu_custom_call.1}
  #allocation0 [shape = 'u32[]', space=smem, size = 0x4, offset = 0x4, fixed_abs, tag = 'smem constant byte address 0x4 - core index']
  #allocation1 [shape = 'u32[144,128]{1,0:T(1,128)}', space=vmem, size = 0x12000, scoped, tag = 'internal scratch']
  %s0 = inlined_call_operand.hbm [shape: f32[2,4,256], index: 0, kind: input, shape index: {}]
  %s1 = inlined_call_operand.vmem [shape: f32[4,2], index: 1, kind: input, shape index: {}]
  %s2 = inlined_call_operand.vmem [shape: f32[1,2], index: 2, kind: input, shape index: {}]
  %s3 = inlined_call_operand.vmem [shape: f32[2,4], index: 3, kind: input, shape index: {}]
  %s4 = inlined_call_operand.vmem [shape: f32[1,4], index: 4, kind: input, shape index: {}]
  %s5 = inlined_call_operand.hbm [shape: f32[2,4,256], index: 5, kind: output, shape index: {}]
  %s6 = sld [smem:[#allocation0]]
  $region57: #{tpu_custom_call.1} parent=0
    _
  %s8 = ssub.s32 1, %s6
  %s9 = scalar_select 0, %s8, %s6
  $region1: #{tpu_custom_call.1} parent=0
    #allocation2 [shape = 'u8[8192]{0}', space=vmem, size = 0x2000, scoped, tag = 'input window, operand 0']
    #allocation3 [shape = 's32[2]{0}', space=sflag, size = 0x8, scoped, tag = 'scoped memory for tpu_custom_call.1']
    #allocation4 [shape = 's32[2]{0}', space=sflag, size = 0x8, scoped, tag = 'scoped memory for tpu_custom_call.1']
    #allocation5 [shape = 'u8[8192]{0}', space=vmem, size = 0x2000, scoped, tag = 'output window, operand 0']
    %10 = vsyncpa [#allocation3], 0
    %s11 = scalar_lea.sflag [#allocation3], 1
    %12 = vsyncpa %s11, 0
    %13 = vsyncpa [#allocation4], 0
    %s14 = scalar_lea.sflag [#allocation4], 1
    %15 = vsyncpa %s14, 0
    loop: start=0, step=1, limit=4
    $region2: #{tpu_custom_call.1} parent=1 // loop_pre_header
      _
    $region3: #{tpu_custom_call.1} parent=1 // loop_header
      %s17 = sphi 0, %s21
      %p18 = scmp.ge.s32.totalorder %s17, 4
      %s27 = sphi 0, %s29
      %s30 = sphi 0, %s27
      %s31 = sphi 0, %s30
      %s47 = sphi 0, %s31
      %s51 = sphi 0, %s51
      %s53 = sphi 0, %s51
      %s54 = sphi 0, %s53
      %s68 = sphi 0, %s54
      %s72 = sphi 0, %s72
      %s74 = sphi 0, %s72
      %s75 = sphi 0, %s74
      %s89 = sphi 0, %s75
      %s93 = sphi 0, %s93
      %s95 = sphi 0, %s93
      %s96 = sphi 0, %s95
      %s110 = sphi 0, %s96
      %s114 = sphi 0, %s114
      %s116 = sphi 0, %s114
      %s117 = sphi 0, %s116
      %s131 = sphi 0, %s117
      %s137 = sphi 0, %s139
      %s140 = sphi 0, %s137
      %s141 = sphi 0, %s140
      %s157 = sphi 0, %s141
    $region4: #{tpu_custom_call.1} parent=1 // loop_header_branch
      %20 = sbr.rel (%p18) target = $region8
    $region5: #{tpu_custom_call.1} parent=1 // loop_body
      %s22 = ssub.s32 %s17, 1
      %s23 = ssub.s32 %s17, 2
      %s24 = sadd.s32 %s17, 1
      %s25 = ssub.s32 %s17, %s24
      %p26 = scmp.eq.s32.totalorder %s25, 0
      %s28 = sadd.s32 %s27, 1
      %s29 = scalar_select %p26, %s27, %s28
      %p32 = pneg %p26
      %p33 = scmp.eq.s32.totalorder %s17, 1
      %p34 = por %p32, %p33
      %p35 = scmp.ne.s32.totalorder %s27, %s30
      %p36 = scmp.eq.s32.totalorder %s17, 0
      %p37 = por %p35, %p36
      %p38 = scmp.ne.s32.totalorder %s27, %s30
      %p39 = scmp.eq.s32.totalorder %s22, 1
      %p40 = por %p38, %p39
      %p41 = scmp.ne.s32.totalorder %s30, %s31
      %p42 = scmp.eq.s32.totalorder %s22, 0
      %p43 = por %p41, %p42
      %p44 = scmp.ne.s32.totalorder %s30, %s31
      %p45 = scmp.eq.s32.totalorder %s23, 1
      %p46 = por %p44, %p45
      %p48 = scmp.ne.s32.totalorder %s31, %s47
      %p49 = scmp.eq.s32.totalorder %s23, 0
      %p50 = por %p48, %p49
      %s52 = sadd.s32 %s51, 1
      %p55 = scmp.eq.s32.totalorder %s17, 1
      %p56 = scmp.ne.s32.totalorder %s51, %s53
      %p57 = scmp.eq.s32.totalorder %s17, 0
      %p58 = por %p56, %p57
      %p59 = scmp.ne.s32.totalorder %s51, %s53
      %p60 = scmp.eq.s32.totalorder %s22, 1
      %p61 = por %p59, %p60
      %p62 = scmp.ne.s32.totalorder %s53, %s54
      %p63 = scmp.eq.s32.totalorder %s22, 0
      %p64 = por %p62, %p63
      %p65 = scmp.ne.s32.totalorder %s53, %s54
      %p66 = scmp.eq.s32.totalorder %s23, 1
      %p67 = por %p65, %p66
      %p69 = scmp.ne.s32.totalorder %s54, %s68
      %p70 = scmp.eq.s32.totalorder %s23, 0
      %p71 = por %p69, %p70
      %s73 = sadd.s32 %s72, 1
      %p76 = scmp.eq.s32.totalorder %s17, 1
      %p77 = scmp.ne.s32.totalorder %s72, %s74
      %p78 = scmp.eq.s32.totalorder %s17, 0
      %p79 = por %p77, %p78
      %p80 = scmp.ne.s32.totalorder %s72, %s74
      %p81 = scmp.eq.s32.totalorder %s22, 1
      %p82 = por %p80, %p81
      %p83 = scmp.ne.s32.totalorder %s74, %s75
      %p84 = scmp.eq.s32.totalorder %s22, 0
      %p85 = por %p83, %p84
      %p86 = scmp.ne.s32.totalorder %s74, %s75
      %p87 = scmp.eq.s32.totalorder %s23, 1
      %p88 = por %p86, %p87
      %p90 = scmp.ne.s32.totalorder %s75, %s89
      %p91 = scmp.eq.s32.totalorder %s23, 0
      %p92 = por %p90, %p91
      %s94 = sadd.s32 %s93, 1
      %p97 = scmp.eq.s32.totalorder %s17, 1
      %p98 = scmp.ne.s32.totalorder %s93, %s95
      %p99 = scmp.eq.s32.totalorder %s17, 0
      %p100 = por %p98, %p99
      %p101 = scmp.ne.s32.totalorder %s93, %s95
      %p102 = scmp.eq.s32.totalorder %s22, 1
      %p103 = por %p101, %p102
      %p104 = scmp.ne.s32.totalorder %s95, %s96
      %p105 = scmp.eq.s32.totalorder %s22, 0
      %p106 = por %p104, %p105
      %p107 = scmp.ne.s32.totalorder %s95, %s96
      %p108 = scmp.eq.s32.totalorder %s23, 1
      %p109 = por %p107, %p108
      %p111 = scmp.ne.s32.totalorder %s96, %s110
      %p112 = scmp.eq.s32.totalorder %s23, 0
      %p113 = por %p111, %p112
      %s115 = sadd.s32 %s114, 1
      %p118 = scmp.eq.s32.totalorder %s17, 1
      %p119 = scmp.ne.s32.totalorder %s114, %s116
      %p120 = scmp.eq.s32.totalorder %s17, 0
      %p121 = por %p119, %p120
      %p122 = scmp.ne.s32.totalorder %s114, %s116
      %p123 = scmp.eq.s32.totalorder %s22, 1
      %p124 = por %p122, %p123
      %p125 = scmp.ne.s32.totalorder %s116, %s117
      %p126 = scmp.eq.s32.totalorder %s22, 0
      %p127 = por %p125, %p126
      %p128 = scmp.ne.s32.totalorder %s116, %s117
      %p129 = scmp.eq.s32.totalorder %s23, 1
      %p130 = por %p128, %p129
      %p132 = scmp.ne.s32.totalorder %s117, %s131
      %p133 = scmp.eq.s32.totalorder %s23, 0
      %p134 = por %p132, %p133
      %s135 = ssub.s32 %s17, %s24
      %p136 = scmp.eq.s32.totalorder %s135, 0
      %s138 = sadd.s32 %s137, 1
      %s139 = scalar_select %p136, %s137, %s138
      %p142 = pneg %p136
      %p143 = scmp.eq.s32.totalorder %s17, 1
      %p144 = por %p142, %p143
      %p145 = scmp.ne.s32.totalorder %s137, %s140
      %p146 = scmp.eq.s32.totalorder %s17, 0
      %p147 = por %p145, %p146
      %p148 = scmp.ne.s32.totalorder %s137, %s140
      %p149 = scmp.eq.s32.totalorder %s22, 1
      %p150 = por %p148, %p149
      %p151 = scmp.ne.s32.totalorder %s140, %s141
      %p152 = scmp.eq.s32.totalorder %s22, 0
      %p153 = por %p151, %p152
      %p154 = scmp.ne.s32.totalorder %s140, %s141
      %p155 = scmp.eq.s32.totalorder %s23, 1
      %p156 = por %p154, %p155
      %p158 = scmp.ne.s32.totalorder %s141, %s157
      %p159 = scmp.eq.s32.totalorder %s23, 0
      %p160 = por %p158, %p159
      %p161 = scmp.le.s32.totalorder 1, %s17
      %p162 = scmp.lt.s32.totalorder %s17, 3
      %p163 = pnand %p161, %p162
      %p164 = pneg %p163
      // Predicated region
      $region9: #{tpu_custom_call.1} parent=5 // pred_check
        _
      $region10: #{tpu_custom_call.1} parent=5 // pred_check_branch
        %166 = sbr.rel (%p163) target = $region12
      $region11: #{tpu_custom_call.1} parent=5 // pred_region
        %s167 = ssub.s32 %s17, 1
        // Predicated region
        $region13: #{tpu_custom_call.1} parent=11 // pred_check
          %p168 = pneg %p64
        $region14: #{tpu_custom_call.1} parent=11 // pred_check_branch
          %170 = sbr.rel (%p168) target = $region16
        $region15: #{tpu_custom_call.1} parent=11 // pred_region
          _
        $region16: #{tpu_custom_call.1} parent=11 // pred_fallthru
          _
        // Predicated region
        $region17: #{tpu_custom_call.1} parent=11 // pred_check
          %p171 = pneg %p85
        $region18: #{tpu_custom_call.1} parent=11 // pred_check_branch
          %173 = sbr.rel (%p171) target = $region20
        $region19: #{tpu_custom_call.1} parent=11 // pred_region
          _
        $region20: #{tpu_custom_call.1} parent=11 // pred_fallthru
          _
        // Predicated region
        $region21: #{tpu_custom_call.1} parent=11 // pred_check
          %p174 = pneg %p106
        $region22: #{tpu_custom_call.1} parent=11 // pred_check_branch
          %176 = sbr.rel (%p174) target = $region24
        $region23: #{tpu_custom_call.1} parent=11 // pred_region
          _
        $region24: #{tpu_custom_call.1} parent=11 // pred_fallthru
          _
        // Predicated region
        $region25: #{tpu_custom_call.1} parent=11 // pred_check
          %p177 = pneg %p127
        $region26: #{tpu_custom_call.1} parent=11 // pred_check_branch
          %179 = sbr.rel (%p177) target = $region28
        $region27: #{tpu_custom_call.1} parent=11 // pred_region
          _
        $region28: #{tpu_custom_call.1} parent=11 // pred_fallthru
          _
      $region12: #{tpu_custom_call.1} parent=5 // pred_fallthru
        _
      %p180 = scmp.lt.s32.totalorder %s17, 2
      // Predicated region
      $region29: #{tpu_custom_call.1} parent=5 // pred_check
        %p181 = pneg %p180
      $region30: #{tpu_custom_call.1} parent=5 // pred_check_branch
        %183 = sbr.rel (%p181) target = $region32
      $region31: #{tpu_custom_call.1} parent=5 // pred_region
        // Predicated region
        $region33: #{tpu_custom_call.1} parent=31 // pred_check
          %p184 = pneg %p37
        $region34: #{tpu_custom_call.1} parent=31 // pred_check_branch
          %186 = sbr.rel (%p184) target = $region36
        $region35: #{tpu_custom_call.1} parent=31 // pred_region
          %s187 = sand.u32 %s27, 1
          %s188 = scalar_lea.sflag [#allocation3], %s187
          %s189 = sand.u32 %s27, 1
          %s190 = smul.addr %s189, 8
          %s191 = scalar_lea.vmem [#allocation2], %s190
          %s193 = ssub.s32 128, 128
          %194 = vsyncadd %s188, %s193
          %s195 = smul.addr %s17, 2
          %s196 = smul.addr %s195, 64
          %s197 = scalar_lea.hbm %s0, %s196
          %s199 = sshll.u32 %s191, 4
          %s200 = int_to_ptr.vmem [resolvable:$true] %s199
          %202 = dma.hbm_to_vmem [thread:$0]  %s197, 128, %s200, %s188
        $region36: #{tpu_custom_call.1} parent=31 // pred_fallthru
          _
      $region32: #{tpu_custom_call.1} parent=5 // pred_fallthru
        _
      %p203 = scmp.le.s32.totalorder 1, %s17
      %p204 = scmp.lt.s32.totalorder %s17, 3
      %p205 = pnand %p203, %p204
      %p206 = pneg %p205
      // Predicated region
      $region37: #{tpu_custom_call.1} parent=5 // pred_check
        _
      $region38: #{tpu_custom_call.1} parent=5 // pred_check_branch
        %208 = sbr.rel (%p205) target = $region40
      $region39: #{tpu_custom_call.1} parent=5 // pred_region
        %s209 = ssub.s32 %s17, 1
        %s210 = sand.u32 %s30, 1
        %s211 = scalar_lea.sflag [#allocation3], %s210
        %s212 = sand.u32 %s30, 1
        %s213 = smul.addr %s212, 8
        %s214 = scalar_lea.vmem [#allocation2], %s213
        // Predicated region
        $region41: #{tpu_custom_call.1} parent=39 // pred_check
          %p215 = pneg %p43
        $region42: #{tpu_custom_call.1} parent=39 // pred_check_branch
          %217 = sbr.rel (%p215) target = $region44
        $region43: #{tpu_custom_call.1} parent=39 // pred_region
          %218 = dma.done %s211, 128
        $region44: #{tpu_custom_call.1} parent=39 // pred_fallthru
          _
        %s219 = sand.u32 %s30, 1
        %s220 = scalar_lea.sflag [#allocation3], %s219
        %s221 = sand.u32 %s30, 1
        %s222 = smul.addr %s221, 8
        %s223 = scalar_lea.vmem [#allocation2], %s222
        %p224 = pneg %p43
        %p225 = pneg %p40
        %p226 = pneg %p64
        %p227 = pneg %p61
        %p228 = pneg %p85
        %p229 = pneg %p82
        %p230 = pneg %p106
        %p231 = pneg %p103
        %p232 = pneg %p127
        %p233 = pneg %p124
        %p234 = pneg %p153
        %p235 = pneg %p150
        %s236 = sand.u32 %s140, 1
        %s237 = scalar_lea.sflag [#allocation4], %s236
        %s238 = sand.u32 %s140, 1
        %s239 = smul.addr %s238, 8
        %s240 = scalar_lea.vmem [#allocation5], %s239
        %v241 = vld [vmem:[%s214] sm:$0xff]
        %v243 = vcombine.high %v241, %v241
        %vm245 = vcmask 1043456
        %v246 = vsel %vm245, %v241, 0.0
        %v247 = vsel %vm245, %v243, 0.0
        %v248 = vadd.f32 %v246, %v247
        %249 = vadd.xlane.f32.xlu0 %v248
        %v250 = vpop.xlane.xlu0 %249
        %v251 = vmul.f32 %v250, 0.00390625
        %v252 = vld [vmem:[%s1] sm:$0xf]
        %v253 = vld [vmem:[%s2] sm:$0x1]
        %v254 = vld [vmem:[%s3] sm:$0x3]
        %v255 = vld [vmem:[%s4] sm:$0x1]
        %v256 = vmul.f32 %v251, %v252
        %vm257 = vcmask 11264
        %v258 = vsel %vm257, %v256, 0.0
        %v259 = vrot.slane %v258, 4
        %v260 = vadd.f32 %v258, %v259
        %v261 = vrot.slane %v260, 2
        %v262 = vadd.f32 %v260, %v261
        %v263 = vrot.slane %v262, 1
        %v264 = vadd.f32 %v262, %v263
        %v265 = vadd.f32 %v264, %v253
        %vm266 = vcmp.gt.f32.partialorder %v265, 0.0
        %v267 = vmul.f32 %v265, 0.05
        %v268 = vsel %vm266, %v265, %v267
        %v269 = vlaneseq
        %v270 = vshrl.u32 %v269, 7
        %v271 = vsub.s32 0, %v270
        %v272 = vrot.slane %v268, %v271
        %274 = vbcast.lane.b32.xlu0 %v272, 256
        %v275 = vpop.permute.xlu0 %274
        %v276 = vmul.f32 %v275, %v254
        %vm277 = vcmask 25600
        %v278 = vsel %vm277, %v276, 0.0
        %v279 = vrot.slane %v278, 4
        %v280 = vadd.f32 %v278, %v279
        %v281 = vrot.slane %v280, 2
        %v282 = vadd.f32 %v280, %v281
        %v283 = vrot.slane %v282, 1
        %v284 = vadd.f32 %v282, %v283
        %v285 = vadd.f32 %v284, %v255
        %v286 = vxor.u32 %v285, 2147483648
        %v287 = vmul.f32 %v286, 1.442695
        %v288 = vpow.pop %v287
        %v289 = vadd.f32 %v288, 1.0
        %v290 = vrcp.pop %v289
        %v291 = vmul.f32 1.0, %v290
        %v292 = vlaneseq
        %v293 = vshrl.u32 %v292, 7
        %v294 = vsub.s32 0, %v293
        %v295 = vrot.slane %v291, %v294
        %297 = vbcast.lane.b32.xlu0 %v295, 256
        %v298 = vpop.permute.xlu0 %297
        %v301 = vunpack.c.l.s4 839922192
        %v302 = vunpack.c.0.s8 %v301
        %v303 = vlaneseq
        %v304 = vshrl.u32 %v303, 7
        %v305 = vsub.s32 %v302, %v304
        %v306 = vrot.slane %v298, %v305
        %v308 = vmul.f32 %v241, %v306
        %309 = vst [vmem:[%s240] sm:$0xff] %v308
        %s310 = sand.u32 %s140, 1
        %s311 = scalar_lea.sflag [#allocation4], %s310
        %s312 = sand.u32 %s140, 1
        %s313 = smul.addr %s312, 8
        %s314 = scalar_lea.vmem [#allocation5], %s313
        // Predicated region
        $region45: #{tpu_custom_call.1} parent=39 // pred_check
          %p315 = pneg %p150
        $region46: #{tpu_custom_call.1} parent=39 // pred_check_branch
          %317 = sbr.rel (%p315) target = $region48
        $region47: #{tpu_custom_call.1} parent=39 // pred_region
          %s319 = ssub.s32 128, 128
          %320 = vsyncadd %s311, %s319
          %s321 = smul.addr %s22, 2
          %s322 = smul.addr %s321, 64
          %s323 = scalar_lea.hbm %s5, %s322
          %s325 = sshll.u32 %s314, 4
          %s326 = int_to_ptr.vmem [resolvable:$true] %s325
          %328 = dma.vmem_to_hbm [thread:$0]  %s326, 128, %s323, %s311
        $region48: #{tpu_custom_call.1} parent=39 // pred_fallthru
          _
      $region40: #{tpu_custom_call.1} parent=5 // pred_fallthru
        _
      %p329 = scmp.le.s32.totalorder 2, %s17
      // Predicated region
      $region49: #{tpu_custom_call.1} parent=5 // pred_check
        %p330 = pneg %p329
      $region50: #{tpu_custom_call.1} parent=5 // pred_check_branch
        %332 = sbr.rel (%p330) target = $region52
      $region51: #{tpu_custom_call.1} parent=5 // pred_region
        %s333 = ssub.s32 %s17, 2
        // Predicated region
        $region53: #{tpu_custom_call.1} parent=51 // pred_check
          %p334 = pneg %p156
        $region54: #{tpu_custom_call.1} parent=51 // pred_check_branch
          %336 = sbr.rel (%p334) target = $region56
        $region55: #{tpu_custom_call.1} parent=51 // pred_region
          %s337 = sand.u32 %s141, 1
          %s338 = scalar_lea.sflag [#allocation4], %s337
          %s339 = sand.u32 %s141, 1
          %s340 = smul.addr %s339, 8
          %s341 = scalar_lea.vmem [#allocation5], %s340
          %342 = dma.done %s338, 128
        $region56: #{tpu_custom_call.1} parent=51 // pred_fallthru
          _
      $region52: #{tpu_custom_call.1} parent=5 // pred_fallthru
        _
    $region6: #{tpu_custom_call.1} parent=1 // loop_footer
      %s21 = sadd.s32 1, %s17
    $region7: #{tpu_custom_call.1} parent=1 // loop_footer_branch
      %16 = sbr.rel target = $region3
    $region8: #{tpu_custom_call.1} parent=1 // loop_exit
      _
    %343 = vsyncpa [#allocation3], 1
    %s344 = scalar_lea.sflag [#allocation3], 1
    %345 = vsyncpa %s344, 1
    %346 = vsyncpa [#allocation4], 1
    %s347 = scalar_lea.sflag [#allocation4], 1
    %348 = vsyncpa %s347, 1

</llo_original>
